<compile_context>
chip_gen: v7x
topology: tpu7x:2x2x1
jax: 0.10.0
libtpu: 0.0.40
codegen_flags: <defaults>
</compile_context>

<pallas_src>
import functools

import jax
import jax.numpy as jnp
from jax.experimental import pallas as pl
from jax.experimental.pallas import tpu as pltpu


def _frn_kernel(x_ref, gb_ref, o_ref, *, eps, tau, inv_hw, inv_hwm1):
    # x_ref: (TM, HW) native dtype; gb_ref: (TM, 2) f32 [gamma, beta];
    # o_ref: (TM, HW) native dtype.
    x = x_ref[...].astype(jnp.float32)

    # Mean (reduction over the logical HW lanes; Mosaic masks any lane padding).
    s = jnp.sum(x, axis=-1, keepdims=True)                  # (TM, 1)
    mean = s * jnp.float32(inv_hw)

    # Two-pass unbiased variance (torch.var default, ddof=1): robust against
    # cancellation when |mean| >> std, and essentially free while HBM-bound.
    d = x - mean                                            # (TM, HW)
    var = jnp.sum(d * d, axis=-1, keepdims=True) * jnp.float32(inv_hwm1)
    inv_std = jax.lax.rsqrt(var + jnp.float32(eps))         # EUP

    # Fused normalize + affine: y = (x - mean) * (inv_std * gamma) + beta.
    a = inv_std * gb_ref[:, 0:1]                            # (TM, 1)
    y = d * a + gb_ref[:, 1:2]                              # (TM, HW)

    # Thresholded linear unit: max(y, tau) (tau is a fixed scalar in the module).
    # TODO(synk): on v7x with bf16 inputs, doing this second pass in bf16
    # (cast a/beta per-row) would relieve the VALU; kept f32 for accuracy.
    o_ref[...] = jnp.maximum(y, jnp.float32(tau)).astype(o_ref.dtype)


def filter_response_norm(x, gamma, beta, *, eps: float = 1e-6, tau: float = 1e-6):
    """x: (N, C, H, W); gamma/beta: (C,). Returns (N, C, H, W) in x.dtype."""
    n, c, h, w = x.shape
    hw = h * w
    r = n * c
    x2 = x.reshape(r, hw)  # native dtype; cast to f32 happens inside the kernel

    # Per-row [gamma, beta] (row = b*C + c), folded into one small f32 array.
    gb = jnp.stack(
        [jnp.tile(gamma.astype(jnp.float32), n),
         jnp.tile(beta.astype(jnp.float32), n)],
        axis=-1,
    )  # (r, 2)

    # ---- VMEM budget (generation-aware, with a safe fallback) ----
    try:
        phys_vmem = int(pltpu.get_tpu_info().vmem_capacity_bytes)
    except Exception:
        phys_vmem = 64 * 1024 * 1024  # conservative: assume v7x-sized VMEM
    # 48 MiB on v7x (64 MiB physical), 64 MiB on v5e/v6e (128 MiB physical).
    vmem_limit = int(min(max(phys_vmem // 2, 48 * 1024 * 1024), 64 * 1024 * 1024))
    budget = (vmem_limit * 3) // 4  # headroom for compiler scratch

    # Live-VMEM estimate per row of the block:
    #   2x input block (double-buffered, native) + 2x output block (native)
    #   + ~3 full-tile f32 temporaries (x cast, d, y).
    itemsize = jnp.dtype(x.dtype).itemsize
    live_bytes_per_row = hw * (4 * itemsize + 12)
    tm_budget = max(8, (budget // live_bytes_per_row) // 8 * 8)
    # Keep >= ~4 grid steps when rows allow it, so v7x can shard the parallel
    # axis across both TensorCores.
    tm_grid = max(8, (pl.cdiv(r, 4) // 8) * 8)
    tm = min(tm_budget, tm_grid, -(-r // 8) * 8)
    # TODO(synk): if a single (8, HW) f32 block ever exceeds the VMEM budget
    # (HW ~ > 1e6 elements), the reduction axis would also need grid splitting.

    grid = (pl.cdiv(r, tm),)  # partial boundary block handled by Pallas

    kernel = functools.partial(
        _frn_kernel,
        eps=float(eps),
        tau=float(tau),
        inv_hw=1.0 / hw,
        # Note: torch.var(ddof=1) is NaN for HW == 1; we return var = 0 there.
        inv_hwm1=1.0 / max(hw - 1, 1),
    )

    out = pl.pallas_call(
        kernel,
        out_shape=jax.ShapeDtypeStruct((r, hw), x.dtype),
        grid_spec=pltpu.PrefetchScalarGridSpec(
            num_scalar_prefetch=0,
            grid=grid,
            in_specs=[
                # Last block dim == full array dim: legal even if HW % 128 != 0.
                pl.BlockSpec((tm, hw), lambda i: (i, 0)),
                pl.BlockSpec((tm, 2), lambda i: (i, 0)),
            ],
            out_specs=pl.BlockSpec((tm, hw), lambda i: (i, 0)),
        ),
        compiler_params=pltpu.CompilerParams(
            dimension_semantics=("parallel",),
            vmem_limit_bytes=vmem_limit,
        ),
    )(x2, gb)

    return out.reshape(n, c, h, w)


def _reference(x, gamma, beta, eps=1e-6, tau=1e-6):
    n, c, h, w = x.shape
    xf = x.reshape(n, c, h * w).astype(jnp.float32)
    mean = jnp.mean(xf, axis=-1, keepdims=True)
    var = jnp.var(xf, axis=-1, keepdims=True, ddof=1)  # unbiased, like torch.var
    y = (xf - mean) / jnp.sqrt(var + eps)
    y = y * gamma.reshape(1, c, 1).astype(jnp.float32)
    y = y + beta.reshape(1, c, 1).astype(jnp.float32)
    return jnp.maximum(y.reshape(n, c, h, w), tau).astype(x.dtype)


if __name__ == "__main__":
    key = jax.random.PRNGKey(0)
    k0, k1, k2, k3 = jax.random.split(key, 4)

    # Case 1: module-init parameters (gamma=1, beta=0), lane-aligned spatial size.
    N, C, H, W = 2, 4, 16, 16
    x = jax.random.normal(k0, (N, C, H, W), dtype=jnp.float32)
    gamma = jnp.ones((C,), dtype=jnp.float32)
    beta = jnp.zeros((C,), dtype=jnp.float32)

    out = filter_response_norm(x, gamma, beta, eps=1e-6, tau=1e-6)
    out = jax.block_until_ready(out)
    ref = _reference(x, gamma, beta)
    assert out.shape == (N, C, H, W)
    assert jnp.allclose(out, ref, atol=1e-4, rtol=1e-4), "mismatch vs reference (case 1)"

    # Case 2: non-trivial gamma/beta, non-lane-aligned HW (7x7 = 49) and a
    # non-multiple-of-tm row count -> exercises masked lanes and the partial
    # boundary row block.
    N2, C2, H2, W2 = 3, 12, 7, 7
    x2 = jax.random.normal(k1, (N2, C2, H2, W2), dtype=jnp.float32) * 2.0 + 0.5
    gamma2 = 1.0 + 0.1 * jax.random.normal(k2, (C2,), dtype=jnp.float32)
    beta2 = 0.1 * jax.random.normal(k3, (C2,), dtype=jnp.float32)

    out2 = filter_response_norm(x2, gamma2, beta2, eps=1e-6, tau=1e-6)
    out2 = jax.block_until_ready(out2)
    ref2 = _reference(x2, gamma2, beta2)
    assert out2.shape == (N2, C2, H2, W2)
    assert jnp.allclose(out2, ref2, atol=1e-4, rtol=1e-4), "mismatch vs reference (case 2)"

    print("KERNEL_OK")
</pallas_src>

<mosaic_0001>
module attributes {stable_mosaic.version = 11 : i64} {
  func.func @_frn_kernel(%arg0: i32, %arg1: memref<8x256xf32, #tpu.memory_space<vmem>>, %arg2: memref<8x2xf32, #tpu.memory_space<vmem>>, %arg3: memref<8x256xf32, #tpu.memory_space<vmem>>) attributes {dimension_semantics = [#tpu.dimension_semantics<parallel>], iteration_bounds = array<i64: 1>, scalar_prefetch = 0 : i64, scratch_operands = 0 : i64, tpu.core_type = #tpu.core_type<tc>, window_params = [{transform_indices = @transform_0, window_bounds = array<i64: 8, 256>}, {transform_indices = @transform_1, window_bounds = array<i64: 8, 2>}, {transform_indices = @transform_2, window_bounds = array<i64: 8, 256>}]} {
    %c0 = arith.constant 0 : index
    %c0_0 = arith.constant 0 : index
    %0 = vector.load %arg1[%c0, %c0_0] : memref<8x256xf32, #tpu.memory_space<vmem>>, vector<8x256xf32>
    %cst = arith.constant dense<0.000000e+00> : vector<8xf32>
    %1 = vector.multi_reduction <add>, %0, %cst [1] : vector<8x256xf32> to vector<8xf32>
    %2 = vector.shape_cast %1 : vector<8xf32> to vector<8x1xf32>
    %cst_1 = arith.constant 3.906250e-03 : f32
    %3 = vector.broadcast %cst_1 : f32 to vector<8x1xf32>
    %4 = arith.mulf %2, %3 : vector<8x1xf32>
    %5 = vector.broadcast %4 : vector<8x1xf32> to vector<8x256xf32>
    %6 = arith.subf %0, %5 : vector<8x256xf32>
    %7 = arith.mulf %6, %6 : vector<8x256xf32>
    %cst_2 = arith.constant dense<0.000000e+00> : vector<8xf32>
    %8 = vector.multi_reduction <add>, %7, %cst_2 [1] : vector<8x256xf32> to vector<8xf32>
    %9 = vector.shape_cast %8 : vector<8xf32> to vector<8x1xf32>
    %cst_3 = arith.constant 0.00392156886 : f32
    %10 = vector.broadcast %cst_3 : f32 to vector<8x1xf32>
    %11 = arith.mulf %9, %10 : vector<8x1xf32>
    %cst_4 = arith.constant 9.99999997E-7 : f32
    %12 = vector.broadcast %cst_4 : f32 to vector<8x1xf32>
    %13 = arith.addf %11, %12 : vector<8x1xf32>
    %14 = math.rsqrt %13 : vector<8x1xf32>
    %c0_5 = arith.constant 0 : index
    %c0_6 = arith.constant 0 : index
    %15 = vector.load %arg2[%c0_5, %c0_6] : memref<8x2xf32, #tpu.memory_space<vmem>>, vector<8x1xf32>
    %16 = arith.mulf %14, %15 : vector<8x1xf32>
    %17 = vector.broadcast %16 : vector<8x1xf32> to vector<8x256xf32>
    %18 = arith.mulf %6, %17 : vector<8x256xf32>
    %c0_7 = arith.constant 0 : index
    %c1 = arith.constant 1 : index
    %19 = vector.load %arg2[%c0_7, %c1] : memref<8x2xf32, #tpu.memory_space<vmem>>, vector<8x1xf32>
    %20 = vector.broadcast %19 : vector<8x1xf32> to vector<8x256xf32>
    %21 = arith.addf %18, %20 : vector<8x256xf32>
    %cst_8 = arith.constant 9.99999997E-7 : f32
    %22 = vector.broadcast %cst_8 : f32 to vector<8x256xf32>
    %23 = arith.maximumf %21, %22 : vector<8x256xf32>
    %c0_9 = arith.constant 0 : index
    %c0_10 = arith.constant 0 : index
    %24 = vector.load %arg3[%c0_9, %c0_10] : memref<8x256xf32, #tpu.memory_space<vmem>>, vector<8x256xf32>
    tpu.vector_store %arg3[%c0_9, %c0_10], %23 {strides = array<i32>} : memref<8x256xf32, #tpu.memory_space<vmem>>, vector<8x256xf32>,
    return
  }
  func.func @transform_0(%arg0: i32) -> (i32, i32) {
    %c0_i32 = arith.constant 0 : i32
    %c0_i32_0 = arith.constant 0 : i32
    return %arg0, %c0_i32 : i32, i32
  }
  func.func @transform_1(%arg0: i32) -> (i32, i32) {
    %c0_i32 = arith.constant 0 : i32
    %c0_i32_0 = arith.constant 0 : i32
    return %arg0, %c0_i32 : i32, i32
  }
  func.func @transform_2(%arg0: i32) -> (i32, i32) {
    %c0_i32 = arith.constant 0 : i32
    %c0_i32_0 = arith.constant 0 : i32
    return %arg0, %c0_i32 : i32, i32
  }
}

</mosaic_0001>

<llo_original>
// kernel: tpu_custom_call.1
$region0: #{tpu_custom_call.1}
  #allocation0 [shape = 'u32[]', space=smem, size = 0x4, offset = 0x4, fixed_abs, tag = 'smem constant byte address 0x4 - core index']
  #allocation1 [shape = 'u32[144,128]{1,0:T(1,128)}', space=vmem, size = 0x12000, scoped, tag = 'internal scratch']
  %s0 = inlined_call_operand.hbm [shape: f32[8,256], index: 0, kind: input, shape index: {}]
  %s1 = inlined_call_operand.vmem [shape: f32[8,2], index: 1, kind: input, shape index: {}]
  %s2 = inlined_call_operand.hbm [shape: f32[8,256], index: 2, kind: output, shape index: {}]
  %s3 = sld [smem:[#allocation0]]
  $region22: #{tpu_custom_call.1} parent=0
    _
  %s5 = ssub.s32 1, %s3
  %s6 = scalar_select 0, %s5, %s3
  $region1: #{tpu_custom_call.1} parent=0
    #allocation2 [shape = 'u8[8192]{0}', space=vmem, size = 0x2000, scoped, tag = 'input window, operand 0, single buffered']
    #allocation3 [shape = 's32[1]{0}', space=sflag, size = 0x4, scoped, tag = 'scoped memory for tpu_custom_call.1']
    #allocation4 [shape = 's32[1]{0}', space=sflag, size = 0x4, scoped, tag = 'scoped memory for tpu_custom_call.1']
    #allocation5 [shape = 'u8[8192]{0}', space=vmem, size = 0x2000, scoped, tag = 'output window, operand 0, single buffered']
    %7 = vsyncpa [#allocation3], 0
    %8 = vsyncpa [#allocation4], 0
    // Predicated region
    $region2: #{tpu_custom_call.1} parent=1 // pred_check
      _
    $region3: #{tpu_custom_call.1} parent=1 // pred_check_branch
      %10 = sbr.rel (0) target = $region5
    $region4: #{tpu_custom_call.1} parent=1 // pred_region
      %s12 = ssub.s32 256, 256
      %13 = vsyncadd [#allocation3], %s12
      %s15 = sshll.u32 [#allocation2], 4
      %s16 = int_to_ptr.vmem [resolvable:$true] %s15
      %18 = dma.hbm_to_vmem [thread:$0]  %s0, 256, %s16, [#allocation3]
    $region5: #{tpu_custom_call.1} parent=1 // pred_fallthru
      _
    // Predicated region
    $region6: #{tpu_custom_call.1} parent=1 // pred_check
      _
    $region7: #{tpu_custom_call.1} parent=1 // pred_check_branch
      %20 = sbr.rel (0) target = $region9
    $region8: #{tpu_custom_call.1} parent=1 // pred_region
      _
    $region9: #{tpu_custom_call.1} parent=1 // pred_fallthru
      _
    // Predicated region
    $region10: #{tpu_custom_call.1} parent=1 // pred_check
      _
    $region11: #{tpu_custom_call.1} parent=1 // pred_check_branch
      %22 = sbr.rel (0) target = $region13
    $region12: #{tpu_custom_call.1} parent=1 // pred_region
      %23 = dma.done [#allocation3], 256
    $region13: #{tpu_custom_call.1} parent=1 // pred_fallthru
      _
    %v24 = vld [vmem:[#allocation2] sm:$0xff]
    %v25 = vld [vmem:[#allocation2 + $0x8] sm:$0xff]
    %v26 = vadd.f32 %v24, %v25
    %27 = vadd.xlane.f32.xlu0 %v26
    %v28 = vpop.xlane.xlu0 %27
    %v29 = vmul.f32 %v28, 0.00390625
    %v30 = vsub.f32 %v24, %v29
    %v31 = vsub.f32 %v25, %v29
    %v32 = vmul.f32 %v30, %v30
    %v33 = vmul.f32 %v31, %v31
    %v34 = vadd.f32 %v32, %v33
    %35 = vadd.xlane.f32.xlu0 %v34
    %v36 = vpop.xlane.xlu0 %35
    %v37 = vmul.f32 %v36, 0.003921569
    %v38 = vadd.f32 %v37, 1e-06
    %v39 = vrsqrt.pop %v38
    %v40 = vld [vmem:[%s1] sm:$0xff]
    %v41 = vmul.f32 %v39, %v40
    %43 = vset.pattern.permute.xlu0 0
    %44 = vperm.xlu0 %43, %v41
    %v45 = vpop.permute.xlu0 %44
    %v47 = vmul.f32 %v30, %v45
    %v48 = vmul.f32 %v31, %v45
    %50 = vset.pattern.permute.xlu0 1
    %51 = vperm.xlu0 %50, %v40
    %v52 = vpop.permute.xlu0 %51
    %v54 = vadd.f32 %v47, %v52
    %v55 = vadd.f32 %v48, %v52
    %v56 = vmax.f32 %v54, 1e-06
    %v57 = vmax.f32 %v55, 1e-06
    %58 = vst [vmem:[#allocation5] sm:$0xff] %v56
    %59 = vst [vmem:[#allocation5 + $0x8] sm:$0xff] %v57
    // Predicated region
    $region14: #{tpu_custom_call.1} parent=1 // pred_check
      _
    $region15: #{tpu_custom_call.1} parent=1 // pred_check_branch
      %61 = sbr.rel (0) target = $region17
    $region16: #{tpu_custom_call.1} parent=1 // pred_region
      %s63 = ssub.s32 256, 256
      %64 = vsyncadd [#allocation4], %s63
      %s66 = sshll.u32 [#allocation5], 4
      %s67 = int_to_ptr.vmem [resolvable:$true] %s66
      %69 = dma.vmem_to_hbm [thread:$0]  %s67, 256, %s2, [#allocation4]
    $region17: #{tpu_custom_call.1} parent=1 // pred_fallthru
      _
    // Predicated region
    $region18: #{tpu_custom_call.1} parent=1 // pred_check
      _
    $region19: #{tpu_custom_call.1} parent=1 // pred_check_branch
      %71 = sbr.rel (0) target = $region21
    $region20: #{tpu_custom_call.1} parent=1 // pred_region
      %72 = dma.done [#allocation4], 256
    $region21: #{tpu_custom_call.1} parent=1 // pred_fallthru
      _
    %73 = vsyncpa [#allocation3], 1
    %74 = vsyncpa [#allocation4], 1

</llo_original>
